<compile_context>
chip_gen: v7x
topology: tpu7x:2x2x1
jax: 0.10.0
libtpu: 0.0.40
codegen_flags: <defaults>
</compile_context>

<pallas_src>
import jax
import jax.numpy as jnp
from jax.experimental import pallas as pl
from jax.experimental.pallas import tpu as pltpu

SUBLANE = 8  # f32 sublane width


def _round_up(n, m):
    return ((n + m - 1) // m) * m


def anet_kernel(x_ref, w1_ref, b1_ref, w2_ref, b2_ref, o_ref):
    # fc1: (TB, S) @ (S, H) + b1, relu
    h = jnp.dot(x_ref[...], w1_ref[...], preferred_element_type=jnp.float32)
    h = jnp.maximum(h + b1_ref[...], 0.0)
    # out: (TB, H) @ (H, A) + b2
    y = jnp.dot(h, w2_ref[...], preferred_element_type=jnp.float32)
    y = y + b2_ref[...]
    # tanh then scale by 2 (action bound); stored at true a_dim width
    o_ref[...] = jnp.tanh(y) * 2.0


def anet_forward(x, w1, b1, w2, b2, *, block_b=4096):
    """x: (B, s_dim) f32; w1: (s_dim, H); b1: (1, H); w2: (H, a_dim); b2: (1, a_dim)."""
    B, s_dim = x.shape
    H = w1.shape[1]
    a_dim = w2.shape[1]

    x = x.astype(jnp.float32)
    w1 = w1.astype(jnp.float32)
    b1 = b1.reshape(1, H).astype(jnp.float32)
    w2 = w2.astype(jnp.float32)
    b2 = b2.reshape(1, a_dim).astype(jnp.float32)

    # Sublane-aligned batch tile; ragged last block handled by Pallas masking.
    TB = min(block_b, _round_up(B, SUBLANE))
    TB = _round_up(TB, SUBLANE)
    grid = (pl.cdiv(B, TB),)

    return pl.pallas_call(
        anet_kernel,
        out_shape=jax.ShapeDtypeStruct((B, a_dim), jnp.float32),
        grid_spec=pltpu.PrefetchScalarGridSpec(
            num_scalar_prefetch=0,
            grid=grid,
            in_specs=[
                pl.BlockSpec((TB, s_dim), lambda i: (i, 0)),   # x tile (pipelined)
                pl.BlockSpec((s_dim, H), lambda i: (0, 0)),    # w1 (resident, DMA'd once)
                pl.BlockSpec((1, H), lambda i: (0, 0)),        # b1
                pl.BlockSpec((H, a_dim), lambda i: (0, 0)),    # w2
                pl.BlockSpec((1, a_dim), lambda i: (0, 0)),    # b2
            ],
            out_specs=pl.BlockSpec((TB, a_dim), lambda i: (i, 0)),
        ),
        compiler_params=pltpu.CompilerParams(
            dimension_semantics=("parallel",),  # independent batch tiles
        ),
    )(x, w1, b1, w2, b2)


def anet_ref(x, w1, b1, w2, b2):
    """Pure-JAX reference (same math as the PyTorch forward)."""
    h = jnp.maximum(x @ w1 + b1.reshape(1, -1), 0.0)
    return jnp.tanh(h @ w2 + b2.reshape(1, -1)) * 2.0


def init_anet_params(key, s_dim, a_dim, hidden=30):
    """Deterministic synthetic init mirroring the PyTorch module:
    weights ~ N(0, 0.1); biases ~ U(-1/sqrt(fan_in), 1/sqrt(fan_in)) (nn.Linear default)."""
    k1, k2, k3, k4 = jax.random.split(key, 4)
    w1 = 0.1 * jax.random.normal(k1, (s_dim, hidden), dtype=jnp.float32)
    w2 = 0.1 * jax.random.normal(k2, (hidden, a_dim), dtype=jnp.float32)
    bnd1 = 1.0 / jnp.sqrt(jnp.float32(s_dim))
    bnd2 = 1.0 / jnp.sqrt(jnp.float32(hidden))
    b1 = jax.random.uniform(k3, (1, hidden), dtype=jnp.float32, minval=-bnd1, maxval=bnd1)
    b2 = jax.random.uniform(k4, (1, a_dim), dtype=jnp.float32, minval=-bnd2, maxval=bnd2)
    return w1, b1, w2, b2


if __name__ == "__main__":
    key = jax.random.PRNGKey(0)
    kx, kp = jax.random.split(key)

    batch, s_dim, a_dim = 8, 16, 4
    x = jax.random.normal(kx, (batch, s_dim), dtype=jnp.float32)
    w1, b1, w2, b2 = init_anet_params(kp, s_dim, a_dim)

    out = jax.block_until_ready(anet_forward(x, w1, b1, w2, b2))
    ref = anet_ref(x, w1, b1, w2, b2)
    assert out.shape == (batch, a_dim)
    assert jnp.allclose(out, ref, atol=1e-5, rtol=1e-5)

    # Exercise the multi-tile + ragged-last-block path (3 grid steps, 452-row tail).
    big_b = 2500
    xb = jax.random.normal(kx, (big_b, s_dim), dtype=jnp.float32)
    out_b = jax.block_until_ready(anet_forward(xb, w1, b1, w2, b2, block_b=1024))
    ref_b = anet_ref(xb, w1, b1, w2, b2)
    assert out_b.shape == (big_b, a_dim)
    assert jnp.allclose(out_b, ref_b, atol=1e-5, rtol=1e-5)

    print("KERNEL_OK")
</pallas_src>

<mosaic_0001>
module attributes {stable_mosaic.version = 11 : i64} {
  func.func @anet_kernel(%arg0: i32, %arg1: memref<8x16xf32, #tpu.memory_space<vmem>>, %arg2: memref<16x30xf32, #tpu.memory_space<vmem>>, %arg3: memref<1x30xf32, #tpu.memory_space<vmem>>, %arg4: memref<30x4xf32, #tpu.memory_space<vmem>>, %arg5: memref<1x4xf32, #tpu.memory_space<vmem>>, %arg6: memref<8x4xf32, #tpu.memory_space<vmem>>) attributes {dimension_semantics = [#tpu.dimension_semantics<parallel>], iteration_bounds = array<i64: 1>, scalar_prefetch = 0 : i64, scratch_operands = 0 : i64, tpu.core_type = #tpu.core_type<tc>, window_params = [{transform_indices = @transform_0, window_bounds = array<i64: 8, 16>}, {pipeline_mode = #tpu.pipeline_mode<synchronous>, transform_indices = @transform_1, window_bounds = array<i64: 16, 30>}, {pipeline_mode = #tpu.pipeline_mode<synchronous>, transform_indices = @transform_2, window_bounds = array<i64: 1, 30>}, {pipeline_mode = #tpu.pipeline_mode<synchronous>, transform_indices = @transform_3, window_bounds = array<i64: 30, 4>}, {pipeline_mode = #tpu.pipeline_mode<synchronous>, transform_indices = @transform_4, window_bounds = array<i64: 1, 4>}, {transform_indices = @transform_5, window_bounds = array<i64: 8, 4>}]} {
    %c0 = arith.constant 0 : index
    %c0_0 = arith.constant 0 : index
    %0 = vector.load %arg1[%c0, %c0_0] : memref<8x16xf32, #tpu.memory_space<vmem>>, vector<8x16xf32>
    %c0_1 = arith.constant 0 : index
    %c0_2 = arith.constant 0 : index
    %1 = vector.load %arg2[%c0_1, %c0_2] : memref<16x30xf32, #tpu.memory_space<vmem>>, vector<16x30xf32>
    %cst = arith.constant dense<0.000000e+00> : vector<8x30xf32>
    %2 = tpu.matmul %0, %1, %cst {dimension_numbers = #tpu.dot_dimension_numbers<[1], [0], [0], [1], [0, 0, 1, 1], [], []>} : vector<8x16xf32>, vector<16x30xf32>, vector<8x30xf32> -> vector<8x30xf32>
    %c0_3 = arith.constant 0 : index
    %c0_4 = arith.constant 0 : index
    %3 = vector.load %arg3[%c0_3, %c0_4] : memref<1x30xf32, #tpu.memory_space<vmem>>, vector<1x30xf32>
    %4 = vector.broadcast %3 : vector<1x30xf32> to vector<8x30xf32>
    %5 = arith.addf %2, %4 : vector<8x30xf32>
    %cst_5 = arith.constant 0.000000e+00 : f32
    %6 = vector.broadcast %cst_5 : f32 to vector<8x30xf32>
    %7 = arith.maximumf %5, %6 : vector<8x30xf32>
    %c0_6 = arith.constant 0 : index
    %c0_7 = arith.constant 0 : index
    %8 = vector.load %arg4[%c0_6, %c0_7] : memref<30x4xf32, #tpu.memory_space<vmem>>, vector<30x4xf32>
    %cst_8 = arith.constant dense<0.000000e+00> : vector<8x4xf32>
    %9 = tpu.matmul %7, %8, %cst_8 {dimension_numbers = #tpu.dot_dimension_numbers<[1], [0], [0], [1], [0, 0, 1, 1], [], []>} : vector<8x30xf32>, vector<30x4xf32>, vector<8x4xf32> -> vector<8x4xf32>
    %c0_9 = arith.constant 0 : index
    %c0_10 = arith.constant 0 : index
    %10 = vector.load %arg5[%c0_9, %c0_10] : memref<1x4xf32, #tpu.memory_space<vmem>>, vector<1x4xf32>
    %11 = vector.broadcast %10 : vector<1x4xf32> to vector<8x4xf32>
    %12 = arith.addf %9, %11 : vector<8x4xf32>
    %13 = math.tanh %12 : vector<8x4xf32>
    %cst_11 = arith.constant 2.000000e+00 : f32
    %14 = vector.broadcast %cst_11 : f32 to vector<8x4xf32>
    %15 = arith.mulf %13, %14 : vector<8x4xf32>
    %c0_12 = arith.constant 0 : index
    %c0_13 = arith.constant 0 : index
    %16 = vector.load %arg6[%c0_12, %c0_13] : memref<8x4xf32, #tpu.memory_space<vmem>>, vector<8x4xf32>
    tpu.vector_store %arg6[%c0_12, %c0_13], %15 {strides = array<i32>} : memref<8x4xf32, #tpu.memory_space<vmem>>, vector<8x4xf32>,
    return
  }
  func.func @transform_0(%arg0: i32) -> (i32, i32) {
    %c0_i32 = arith.constant 0 : i32
    %c0_i32_0 = arith.constant 0 : i32
    return %arg0, %c0_i32 : i32, i32
  }
  func.func @transform_1(%arg0: i32) -> (i32, i32) {
    %c0_i32 = arith.constant 0 : i32
    %c0_i32_0 = arith.constant 0 : i32
    %c0_i32_1 = arith.constant 0 : i32
    return %c0_i32, %c0_i32_0 : i32, i32
  }
  func.func @transform_2(%arg0: i32) -> (i32, i32) {
    %c0_i32 = arith.constant 0 : i32
    %c0_i32_0 = arith.constant 0 : i32
    %c0_i32_1 = arith.constant 0 : i32
    return %c0_i32, %c0_i32_0 : i32, i32
  }
  func.func @transform_3(%arg0: i32) -> (i32, i32) {
    %c0_i32 = arith.constant 0 : i32
    %c0_i32_0 = arith.constant 0 : i32
    %c0_i32_1 = arith.constant 0 : i32
    return %c0_i32, %c0_i32_0 : i32, i32
  }
  func.func @transform_4(%arg0: i32) -> (i32, i32) {
    %c0_i32 = arith.constant 0 : i32
    %c0_i32_0 = arith.constant 0 : i32
    %c0_i32_1 = arith.constant 0 : i32
    return %c0_i32, %c0_i32_0 : i32, i32
  }
  func.func @transform_5(%arg0: i32) -> (i32, i32) {
    %c0_i32 = arith.constant 0 : i32
    %c0_i32_0 = arith.constant 0 : i32
    return %arg0, %c0_i32 : i32, i32
  }
}

</mosaic_0001>

<llo_original>
// kernel: tpu_custom_call.1
$region0: #{tpu_custom_call.1}
  #allocation0 [shape = 'u32[]', space=smem, size = 0x4, offset = 0x4, fixed_abs, tag = 'smem constant byte address 0x4 - core index']
  #allocation1 [shape = 'u32[144,128]{1,0:T(1,128)}', space=vmem, size = 0x12000, scoped, tag = 'internal scratch']
  %s0 = inlined_call_operand.vmem [shape: f32[8,16], index: 0, kind: input, shape index: {}]
  %s1 = inlined_call_operand.vmem [shape: f32[16,30], index: 1, kind: input, shape index: {}]
  %s2 = inlined_call_operand.vmem [shape: f32[1,30], index: 2, kind: input, shape index: {}]
  %s3 = inlined_call_operand.vmem [shape: f32[30,4], index: 3, kind: input, shape index: {}]
  %s4 = inlined_call_operand.vmem [shape: f32[1,4], index: 4, kind: input, shape index: {}]
  %s5 = inlined_call_operand.vmem [shape: f32[8,4], index: 5, kind: output, shape index: {}]
  %s6 = sld [smem:[#allocation0]]
  $region30: #{tpu_custom_call.1} parent=0
    _
  %s8 = ssub.s32 1, %s6
  %s9 = scalar_select 0, %s8, %s6
  // Predicated region
  $region2: #{tpu_custom_call.1} parent=0 // pred_check
    _
  $region3: #{tpu_custom_call.1} parent=0 // pred_check_branch
    %11 = sbr.rel (0) target = $region5
  $region4: #{tpu_custom_call.1} parent=0 // pred_region
    _
  $region5: #{tpu_custom_call.1} parent=0 // pred_fallthru
    _
  // Predicated region
  $region6: #{tpu_custom_call.1} parent=0 // pred_check
    _
  $region7: #{tpu_custom_call.1} parent=0 // pred_check_branch
    %13 = sbr.rel (0) target = $region9
  $region8: #{tpu_custom_call.1} parent=0 // pred_region
    _
  $region9: #{tpu_custom_call.1} parent=0 // pred_fallthru
    _
  // Predicated region
  $region10: #{tpu_custom_call.1} parent=0 // pred_check
    _
  $region11: #{tpu_custom_call.1} parent=0 // pred_check_branch
    %15 = sbr.rel (0) target = $region13
  $region12: #{tpu_custom_call.1} parent=0 // pred_region
    _
  $region13: #{tpu_custom_call.1} parent=0 // pred_fallthru
    _
  // Predicated region
  $region14: #{tpu_custom_call.1} parent=0 // pred_check
    _
  $region15: #{tpu_custom_call.1} parent=0 // pred_check_branch
    %17 = sbr.rel (0) target = $region17
  $region16: #{tpu_custom_call.1} parent=0 // pred_region
    _
  $region17: #{tpu_custom_call.1} parent=0 // pred_fallthru
    _
  // Predicated region
  $region18: #{tpu_custom_call.1} parent=0 // pred_check
    _
  $region19: #{tpu_custom_call.1} parent=0 // pred_check_branch
    %19 = sbr.rel (0) target = $region21
  $region20: #{tpu_custom_call.1} parent=0 // pred_region
    _
  $region21: #{tpu_custom_call.1} parent=0 // pred_fallthru
    _
  %v20 = vld [vmem:[%s0] sm:$0xff]
  %v21 = vld [vmem:[%s1] sm:$0xff]
  %v22 = vld [vmem:[%s1 + $0x8] sm:$0xff]
  %v23 = vld [vmem:[%s2] sm:$0x1]
  %v25 = vlaneseq
  %v26 = vshrl.u32 %v25, 7
  %v27 = vsub.s32 0, %v26
  %v28 = vrot.slane %v23, %v27
  %vm30 = vcmask 130048
  %v32 = vsel %vm30, %v20, 0
  %34 = vmatprep.subr.mxu0 0.0
  %35 = vmatpush1.msra.mxu0 %v21
  %36 = vmatprep.subr.mxu0 0.0
  %37 = vmatpush1.msra.mxu0 %v22
  %38 = vmatprep.subr.mxu0 0.0
  %39 = vmatpush1.msra.mxu0 0.0
  %40 = vmatprep.subr.mxu0 0.0
  %41 = vmatpush1.msra.mxu0 0.0
  %42 = vmatprep.subr.mxu0 0.0
  %43 = vmatpush1.msra.mxu0 0.0
  %44 = vmatprep.subr.mxu0 0.0
  %45 = vmatpush1.msra.mxu0 0.0
  %46 = vmatprep.subr.mxu0 0.0
  %47 = vmatpush1.msra.mxu0 0.0
  %48 = vmatprep.subr.mxu0 0.0
  %49 = vmatpush1.msra.mxu0 0.0
  %50 = vmatprep.subr.mxu0 0.0
  %51 = vmatpush1.msra.mxu0 0.0
  %52 = vmatprep.subr.mxu0 0.0
  %53 = vmatpush1.msra.mxu0 0.0
  %54 = vmatprep.subr.mxu0 0.0
  %55 = vmatpush1.msra.mxu0 0.0
  %56 = vmatprep.subr.mxu0 0.0
  %57 = vmatpush1.msra.mxu0 0.0
  %58 = vmatprep.subr.mxu0 0.0
  %59 = vmatpush1.msra.mxu0 0.0
  %60 = vmatprep.subr.mxu0 0.0
  %61 = vmatpush1.msra.mxu0 0.0
  %62 = vmatprep.subr.mxu0 0.0
  %63 = vmatpush1.msra.mxu0 0.0
  %64 = vmatprep.subr.mxu0 0.0
  %65 = vmatpush1.msra.mxu0 0.0
  %66 = vmatprep.subr.mxu0 0.0
  %67 = vmatpush1.msra.mxu0 0.0
  %68 = vmatprep.subr.mxu0 0.0
  %69 = vmatpush1.msra.mxu0 0.0
  %70 = vmatprep.subr.mxu0 0.0
  %71 = vmatpush1.msra.mxu0 0.0
  %72 = vmatprep.subr.mxu0 0.0
  %73 = vmatpush1.msra.mxu0 0.0
  %74 = vmatprep.subr.mxu0 0.0
  %75 = vmatpush1.msra.mxu0 0.0
  %76 = vmatprep.subr.mxu0 0.0
  %77 = vmatpush1.msra.mxu0 0.0
  %78 = vmatprep.subr.mxu0 0.0
  %79 = vmatpush1.msra.mxu0 0.0
  %80 = vmatprep.subr.mxu0 0.0
  %81 = vmatpush1.msra.mxu0 0.0
  %82 = vmatprep.subr.mxu0 0.0
  %83 = vmatpush1.msra.mxu0 0.0
  %84 = vmatprep.subr.mxu0 0.0
  %85 = vmatpush1.msra.mxu0 0.0
  %86 = vmatprep.subr.mxu0 0.0
  %87 = vmatpush1.msra.mxu0 0.0
  %88 = vmatprep.subr.mxu0 0.0
  %89 = vmatpush1.msra.mxu0 0.0
  %90 = vmatprep.subr.mxu0 0.0
  %91 = vmatpush1.msra.mxu0 0.0
  %92 = vmatprep.subr.mxu0 0.0
  %93 = vmatpush1.msra.mxu0 0.0
  %94 = vmatprep.subr.mxu0 0.0
  %95 = vmatpush1.msra.mxu0 0.0
  %96 = vmatprep.subr.mxu0 0.0
  %97 = vmatpush1.msra.mxu0 0.0
  %98 = vmatprep.mubr.f32.mxu0 0.0
  %99 = vmatmul.mubr.f32.gmra.mrb[0].mxu0 %v32
  %v100 = vpop.f32.mrb[0].mxu0
  %v101 = vadd.f32 %v28, %v100
  %v102 = vpop.f32.mrb[0].mxu0
  %103 = vdwg.mxu0
  %v104 = vmax.f32 %v101, 0.0
  %v105 = vld [vmem:[%s3] sm:$0xff]
  %v106 = vld [vmem:[%s3 + $0x8] sm:$0xff]
  %v107 = vld [vmem:[%s3 + $0x10] sm:$0xff]
  %v108 = vld [vmem:[%s3 + $0x18] sm:$0x3f]
  %v109 = vld [vmem:[%s4] sm:$0x1]
  %v111 = vlaneseq
  %v112 = vshrl.u32 %v111, 7
  %v113 = vsub.s32 0, %v112
  %v114 = vrot.slane %v109, %v113
  %vm116 = vcmask 244736
  %v118 = vsel %vm116, %v104, 0
  %vm120 = vcmask 1045504
  %v122 = vsel %vm120, %v108, 0
  %124 = vmatprep.subr.mxu0 0.0
  %125 = vmatpush1.msra.mxu0 %v105
  %126 = vmatprep.subr.mxu0 0.0
  %127 = vmatpush1.msra.mxu0 %v106
  %128 = vmatprep.subr.mxu0 0.0
  %129 = vmatpush1.msra.mxu0 %v107
  %130 = vmatprep.subr.mxu0 0.0
  %131 = vmatpush1.msra.mxu0 %v122
  %132 = vmatprep.subr.mxu0 0.0
  %133 = vmatpush1.msra.mxu0 0.0
  %134 = vmatprep.subr.mxu0 0.0
  %135 = vmatpush1.msra.mxu0 0.0
  %136 = vmatprep.subr.mxu0 0.0
  %137 = vmatpush1.msra.mxu0 0.0
  %138 = vmatprep.subr.mxu0 0.0
  %139 = vmatpush1.msra.mxu0 0.0
  %140 = vmatprep.subr.mxu0 0.0
  %141 = vmatpush1.msra.mxu0 0.0
  %142 = vmatprep.subr.mxu0 0.0
  %143 = vmatpush1.msra.mxu0 0.0
  %144 = vmatprep.subr.mxu0 0.0
  %145 = vmatpush1.msra.mxu0 0.0
  %146 = vmatprep.subr.mxu0 0.0
  %147 = vmatpush1.msra.mxu0 0.0
  %148 = vmatprep.subr.mxu0 0.0
  %149 = vmatpush1.msra.mxu0 0.0
  %150 = vmatprep.subr.mxu0 0.0
  %151 = vmatpush1.msra.mxu0 0.0
  %152 = vmatprep.subr.mxu0 0.0
  %153 = vmatpush1.msra.mxu0 0.0
  %154 = vmatprep.subr.mxu0 0.0
  %155 = vmatpush1.msra.mxu0 0.0
  %156 = vmatprep.subr.mxu0 0.0
  %157 = vmatpush1.msra.mxu0 0.0
  %158 = vmatprep.subr.mxu0 0.0
  %159 = vmatpush1.msra.mxu0 0.0
  %160 = vmatprep.subr.mxu0 0.0
  %161 = vmatpush1.msra.mxu0 0.0
  %162 = vmatprep.subr.mxu0 0.0
  %163 = vmatpush1.msra.mxu0 0.0
  %164 = vmatprep.subr.mxu0 0.0
  %165 = vmatpush1.msra.mxu0 0.0
  %166 = vmatprep.subr.mxu0 0.0
  %167 = vmatpush1.msra.mxu0 0.0
  %168 = vmatprep.subr.mxu0 0.0
  %169 = vmatpush1.msra.mxu0 0.0
  %170 = vmatprep.subr.mxu0 0.0
  %171 = vmatpush1.msra.mxu0 0.0
  %172 = vmatprep.subr.mxu0 0.0
  %173 = vmatpush1.msra.mxu0 0.0
  %174 = vmatprep.subr.mxu0 0.0
  %175 = vmatpush1.msra.mxu0 0.0
  %176 = vmatprep.subr.mxu0 0.0
  %177 = vmatpush1.msra.mxu0 0.0
  %178 = vmatprep.subr.mxu0 0.0
  %179 = vmatpush1.msra.mxu0 0.0
  %180 = vmatprep.subr.mxu0 0.0
  %181 = vmatpush1.msra.mxu0 0.0
  %182 = vmatprep.subr.mxu0 0.0
  %183 = vmatpush1.msra.mxu0 0.0
  %184 = vmatprep.subr.mxu0 0.0
  %185 = vmatpush1.msra.mxu0 0.0
  %186 = vmatprep.subr.mxu0 0.0
  %187 = vmatpush1.msra.mxu0 0.0
  %188 = vmatprep.mubr.f32.mxu0 0.0
  %189 = vmatmul.mubr.f32.gmra.mrb[0].mxu0 %v118
  %v190 = vpop.f32.mrb[0].mxu0
  %v191 = vadd.f32 %v114, %v190
  %v192 = vpop.f32.mrb[0].mxu0
  %193 = vdwg.mxu0
  %v194 = vtanh.pop %v191
  %v195 = vmul.f32 %v194, 2.0
  %vm196 = vcmask 31744
  %197 = vst.msk [vmem:[%s5] sm:$0xff] %vm196, %v195
  // Predicated region
  $region22: #{tpu_custom_call.1} parent=0 // pred_check
    _
  $region23: #{tpu_custom_call.1} parent=0 // pred_check_branch
    %199 = sbr.rel (0) target = $region25
  $region24: #{tpu_custom_call.1} parent=0 // pred_region
    _
  $region25: #{tpu_custom_call.1} parent=0 // pred_fallthru
    _
  // Predicated region
  $region26: #{tpu_custom_call.1} parent=0 // pred_check
    _
  $region27: #{tpu_custom_call.1} parent=0 // pred_check_branch
    %201 = sbr.rel (0) target = $region29
  $region28: #{tpu_custom_call.1} parent=0 // pred_region
    _
  $region29: #{tpu_custom_call.1} parent=0 // pred_fallthru
    _

</llo_original>
